<compile_context>
chip_gen: v7x
topology: tpu7x:2x2x1
jax: 0.10.0
libtpu: 0.0.40
codegen_flags: <defaults>
</compile_context>

<pallas_src>
import functools

import jax
import jax.numpy as jnp
from jax.experimental import pallas as pl
from jax.experimental.pallas import tpu as pltpu


def _round_up(x, m):
    return (x + m - 1) // m * m


# ---------------------------------------------------------------------------
# Kernel
# ---------------------------------------------------------------------------
def actor_critic_kernel(x_ref, w1_ref, b1_ref, wh_ref, bh_ref, out_ref, *, num_actions):
    # fc1 + ReLU  (f32 accumulation regardless of operand dtype)
    x = x_ref[...]
    h = jnp.dot(x, w1_ref[...], preferred_element_type=jnp.float32) + b1_ref[...]
    h = jnp.maximum(h, 0.0)

    # single fused head matmul: lanes [0, A) = actor logits, lane A = critic value, rest zero-pad
    h = h.astype(wh_ref.dtype)                      # no-op in f32 mode; enables bf16 MXU path
    z = jnp.dot(h, wh_ref[...], preferred_element_type=jnp.float32) + bh_ref[...]

    lane = jax.lax.broadcasted_iota(jnp.int32, z.shape, dimension=1)
    is_logit = lane < num_actions

    # numerically-stable softmax restricted to the first `num_actions` lanes
    logits = jnp.where(is_logit, z, -jnp.inf)
    m = jnp.max(logits, axis=-1, keepdims=True)
    e = jnp.where(is_logit, jnp.exp(logits - m), 0.0)
    denom = jnp.sum(e, axis=-1, keepdims=True)
    inv = pl.reciprocal(denom, approx=True)         # EUP slot
    inv = inv * (2.0 - denom * inv)                 # one Newton step -> f32-accurate, VPU-cheap
    probs = e * inv                                 # already exactly 0 on non-logit lanes

    # lane-dense output slab: probs | value | zeros  (single select)
    out = probs + jnp.where(lane == num_actions, z, 0.0)
    out_ref[...] = out.astype(out_ref.dtype)


# ---------------------------------------------------------------------------
# One-time parameter packing (padding + head fusion) — call at init, not per step.
# ---------------------------------------------------------------------------
def prepare_params(params, *, use_bf16=False):
    """params = (w1 [K,H], b1 [1,H], wa [H,A], ba [1,A], wc [H,1], bc [1,1]) in f32.

    Returns (w1_p, b1_p, wh_p, bh_p, num_actions) with the actor/critic heads fused into one
    lane-dense, 128-padded matrix. Matmul operands optionally bf16; biases stay f32.
    """
    w1, b1, wa, ba, wc, bc = params
    K, H = w1.shape
    A = wa.shape[1]

    f32 = jnp.float32
    op_dtype = jnp.bfloat16 if use_bf16 else f32
    H_pad = _round_up(H, 128)
    N_pad = _round_up(A + 1, 128)          # logits + value lane, padded lane-dense

    w1_p = jnp.zeros((K, H_pad), f32).at[:, :H].set(w1).astype(op_dtype)
    b1_p = jnp.zeros((1, H_pad), f32).at[:, :H].set(b1.reshape(1, H))
    wh_p = (jnp.zeros((H_pad, N_pad), f32)
            .at[:H, :A].set(wa)
            .at[:H, A].set(wc[:, 0])
            .astype(op_dtype))
    bh_p = (jnp.zeros((1, N_pad), f32)
            .at[:, :A].set(ba.reshape(1, A))
            .at[:, A].set(bc.reshape(())))
    return (w1_p, b1_p, wh_p, bh_p, int(A))


def _choose_tile(B, block_b):
    """Pick a batch tile (multiple of 8). When the batch is big enough, make sure the grid has
    >= 2 steps so dimension_semantics=('parallel',) can shard it across v7x's two TensorCores."""
    B8 = _round_up(max(B, 1), 8)
    TB = min(block_b, B8)
    if B8 > 8 and B8 <= TB:
        TB = _round_up(pl.cdiv(B8, 2), 8)
    B_pad = _round_up(B8, TB)
    return TB, B_pad


# ---------------------------------------------------------------------------
# Forward
# ---------------------------------------------------------------------------
def actor_critic_forward(x, packed_params, *, block_b=512):
    """x: [B, input_size] f32. packed_params from prepare_params().
    Returns (action_probs [B, A], state_value [B, 1])."""
    w1_p, b1_p, wh_p, bh_p, A = packed_params
    B, K = x.shape
    assert w1_p.shape[0] == K, "input_size mismatch with packed params"
    H_pad = w1_p.shape[1]
    N_pad = wh_p.shape[1]
    op_dtype = w1_p.dtype
    f32 = jnp.float32

    TB, B_pad = _choose_tile(B, block_b)

    # Only pad/cast x if actually needed (no pad pass when B is already tile-aligned & f32).
    if B_pad == B and x.dtype == op_dtype:
        x_p = x
    else:
        x_p = jnp.zeros((B_pad, K), op_dtype).at[:B, :].set(x.astype(op_dtype))

    grid = (B_pad // TB,)
    kernel = functools.partial(actor_critic_kernel, num_actions=A)

    # size-derived VMEM limit (double-buffered I/O tiles + resident weights) with 2x headroom
    dsize = jnp.dtype(op_dtype).itemsize
    weight_bytes = (w1_p.size + wh_p.size) * dsize + (b1_p.size + bh_p.size) * 4
    io_bytes = 2 * TB * K * dsize + 2 * TB * N_pad * 4
    vmem_limit = int(min(max(2 * (weight_bytes + io_bytes) + (1 << 20), 2 << 20), 16 << 20))

    flops = 2 * B_pad * (K * H_pad + H_pad * N_pad)
    bytes_accessed = (x_p.size * dsize + weight_bytes + 4 * B_pad * N_pad)
    cost = pl.CostEstimate(flops=flops,
                           transcendentals=B_pad * N_pad,
                           bytes_accessed=bytes_accessed)

    out = pl.pallas_call(
        kernel,
        out_shape=jax.ShapeDtypeStruct((B_pad, N_pad), f32),
        grid=grid,
        in_specs=[
            pl.BlockSpec((TB, K), lambda i: (i, 0)),         # x: tiled over batch, K unpadded
            pl.BlockSpec((K, H_pad), lambda i: (0, 0)),      # w1: resident full block
            pl.BlockSpec((1, H_pad), lambda i: (0, 0)),      # b1
            pl.BlockSpec((H_pad, N_pad), lambda i: (0, 0)),  # fused heads
            pl.BlockSpec((1, N_pad), lambda i: (0, 0)),      # fused head bias
        ],
        out_specs=pl.BlockSpec((TB, N_pad), lambda i: (i, 0)),
        compiler_params=pltpu.CompilerParams(
            dimension_semantics=("parallel",),               # megacore-shard the batch on v7x
            vmem_limit_bytes=vmem_limit,
        ),
        cost_estimate=cost,
    )(x_p, w1_p, b1_p, wh_p, bh_p)

    # single slice of the lane-dense slab, split afterwards
    head = out[:B, :A + 1]
    probs = head[:, :A]
    value = head[:, A:A + 1]
    return probs, value


# ---------------------------------------------------------------------------
# Deterministic synthetic parameters (PyTorch nn.Linear shapes, stored transposed).
# ---------------------------------------------------------------------------
def init_params(key, input_size, num_actions, hidden=64):
    ks = jax.random.split(key, 6)
    # nn.Linear(in, out): weight (out, in), bias (out,). We store weight.T = (in, out).
    w1 = jax.random.normal(ks[0], (input_size, hidden), jnp.float32) * 0.1
    b1 = jax.random.normal(ks[1], (1, hidden), jnp.float32) * 0.1
    wa = jax.random.normal(ks[2], (hidden, num_actions), jnp.float32) * 0.1
    ba = jax.random.normal(ks[3], (1, num_actions), jnp.float32) * 0.1
    wc = jax.random.normal(ks[4], (hidden, 1), jnp.float32) * 0.1
    bc = jax.random.normal(ks[5], (1, 1), jnp.float32) * 0.1
    return (w1, b1, wa, ba, wc, bc)


if __name__ == "__main__":
    key = jax.random.PRNGKey(0)
    B, input_size, num_actions = 8, 32, 16

    k_x, k_p = jax.random.split(key)
    x = jax.random.normal(k_x, (B, input_size), jnp.float32)
    params = init_params(k_p, input_size, num_actions)

    # pack once (init-time), reuse every forward call
    packed = prepare_params(params, use_bf16=False)

    probs, value = actor_critic_forward(x, packed)
    jax.block_until_ready((probs, value))

    # lightweight sanity check against a pure-JAX reference
    w1, b1, wa, ba, wc, bc = params
    h_ref = jnp.maximum(x @ w1 + b1, 0.0)
    probs_ref = jax.nn.softmax(h_ref @ wa + ba, axis=-1)
    value_ref = h_ref @ wc + bc
    assert probs.shape == (B, num_actions) and value.shape == (B, 1)
    assert jnp.allclose(probs, probs_ref, atol=1e-5)
    assert jnp.allclose(value, value_ref, atol=1e-5)
    assert jnp.allclose(jnp.sum(probs, axis=-1), 1.0, atol=1e-5)

    # exercise a non-trivial grid (>=2 steps) once to cover the megacore path
    xb = jax.random.normal(k_x, (48, input_size), jnp.float32)
    pb, vb = actor_critic_forward(xb, packed, block_b=16)
    jax.block_until_ready((pb, vb))
    hb = jnp.maximum(xb @ w1 + b1, 0.0)
    assert jnp.allclose(pb, jax.nn.softmax(hb @ wa + ba, axis=-1), atol=1e-5)
    assert jnp.allclose(vb, hb @ wc + bc, atol=1e-5)

    print("KERNEL_OK")
</pallas_src>

<mosaic_0001>
module attributes {stable_mosaic.version = 11 : i64} {
  func.func @actor_critic_kernel(%arg0: i32, %arg1: memref<8x32xf32, #tpu.memory_space<vmem>>, %arg2: memref<32x128xf32, #tpu.memory_space<vmem>>, %arg3: memref<1x128xf32, #tpu.memory_space<vmem>>, %arg4: memref<128x128xf32, #tpu.memory_space<vmem>>, %arg5: memref<1x128xf32, #tpu.memory_space<vmem>>, %arg6: memref<8x128xf32, #tpu.memory_space<vmem>>) attributes {dimension_semantics = [#tpu.dimension_semantics<parallel>], iteration_bounds = array<i64: 1>, scalar_prefetch = 0 : i64, scratch_operands = 0 : i64, tpu.core_type = #tpu.core_type<tc>, window_params = [{transform_indices = @transform_0, window_bounds = array<i64: 8, 32>}, {pipeline_mode = #tpu.pipeline_mode<synchronous>, transform_indices = @transform_1, window_bounds = array<i64: 32, 128>}, {pipeline_mode = #tpu.pipeline_mode<synchronous>, transform_indices = @transform_2, window_bounds = array<i64: 1, 128>}, {pipeline_mode = #tpu.pipeline_mode<synchronous>, transform_indices = @transform_3, window_bounds = array<i64: 128, 128>}, {pipeline_mode = #tpu.pipeline_mode<synchronous>, transform_indices = @transform_4, window_bounds = array<i64: 1, 128>}, {transform_indices = @transform_5, window_bounds = array<i64: 8, 128>}]} {
    %c0 = arith.constant 0 : index
    %c0_0 = arith.constant 0 : index
    %0 = vector.load %arg1[%c0, %c0_0] : memref<8x32xf32, #tpu.memory_space<vmem>>, vector<8x32xf32>
    %c0_1 = arith.constant 0 : index
    %c0_2 = arith.constant 0 : index
    %1 = vector.load %arg2[%c0_1, %c0_2] : memref<32x128xf32, #tpu.memory_space<vmem>>, vector<32x128xf32>
    %cst = arith.constant dense<0.000000e+00> : vector<8x128xf32>
    %2 = tpu.matmul %0, %1, %cst {dimension_numbers = #tpu.dot_dimension_numbers<[1], [0], [0], [1], [0, 0, 1, 1], [], []>} : vector<8x32xf32>, vector<32x128xf32>, vector<8x128xf32> -> vector<8x128xf32>
    %c0_3 = arith.constant 0 : index
    %c0_4 = arith.constant 0 : index
    %3 = vector.load %arg3[%c0_3, %c0_4] : memref<1x128xf32, #tpu.memory_space<vmem>>, vector<1x128xf32>
    %4 = vector.broadcast %3 : vector<1x128xf32> to vector<8x128xf32>
    %5 = arith.addf %2, %4 : vector<8x128xf32>
    %cst_5 = arith.constant 0.000000e+00 : f32
    %6 = vector.broadcast %cst_5 : f32 to vector<8x128xf32>
    %7 = arith.maximumf %5, %6 : vector<8x128xf32>
    %c0_6 = arith.constant 0 : index
    %c0_7 = arith.constant 0 : index
    %8 = vector.load %arg4[%c0_6, %c0_7] : memref<128x128xf32, #tpu.memory_space<vmem>>, vector<128x128xf32>
    %cst_8 = arith.constant dense<0.000000e+00> : vector<8x128xf32>
    %9 = tpu.matmul %7, %8, %cst_8 {dimension_numbers = #tpu.dot_dimension_numbers<[1], [0], [0], [1], [0, 0, 1, 1], [], []>} : vector<8x128xf32>, vector<128x128xf32>, vector<8x128xf32> -> vector<8x128xf32>
    %c0_9 = arith.constant 0 : index
    %c0_10 = arith.constant 0 : index
    %10 = vector.load %arg5[%c0_9, %c0_10] : memref<1x128xf32, #tpu.memory_space<vmem>>, vector<1x128xf32>
    %11 = vector.broadcast %10 : vector<1x128xf32> to vector<8x128xf32>
    %12 = arith.addf %9, %11 : vector<8x128xf32>
    %13 = tpu.iota {dimensions = array<i32: 1>} : vector<8x128xi32>
    %c16_i32 = arith.constant 16 : i32
    %14 = vector.broadcast %c16_i32 : i32 to vector<8x128xi32>
    %15 = arith.cmpi slt, %13, %14 : vector<8x128xi32>
    %cst_11 = arith.constant 0xFF800000 : f32
    %16 = vector.broadcast %cst_11 : f32 to vector<8x128xf32>
    %17 = arith.select %15, %12, %16 : vector<8x128xi1>, vector<8x128xf32>
    %cst_12 = arith.constant dense<0xFF800000> : vector<8xf32>
    %18 = vector.multi_reduction <maximumf>, %17, %cst_12 [1] : vector<8x128xf32> to vector<8xf32>
    %19 = vector.shape_cast %18 : vector<8xf32> to vector<8x1xf32>
    %20 = vector.broadcast %19 : vector<8x1xf32> to vector<8x128xf32>
    %21 = arith.subf %17, %20 : vector<8x128xf32>
    %22 = math.exp %21 : vector<8x128xf32>
    %cst_13 = arith.constant 0.000000e+00 : f32
    %23 = vector.broadcast %cst_13 : f32 to vector<8x128xf32>
    %24 = arith.select %15, %22, %23 : vector<8x128xi1>, vector<8x128xf32>
    %cst_14 = arith.constant dense<0.000000e+00> : vector<8xf32>
    %25 = vector.multi_reduction <add>, %24, %cst_14 [1] : vector<8x128xf32> to vector<8xf32>
    %26 = vector.shape_cast %25 : vector<8xf32> to vector<8x1xf32>
    %27 = tpu.reciprocal %26 {approx = true} : vector<8x1xf32> -> vector<8x1xf32>
    %28 = arith.mulf %26, %27 : vector<8x1xf32>
    %cst_15 = arith.constant 2.000000e+00 : f32
    %29 = vector.broadcast %cst_15 : f32 to vector<8x1xf32>
    %30 = arith.subf %29, %28 : vector<8x1xf32>
    %31 = arith.mulf %27, %30 : vector<8x1xf32>
    %32 = vector.broadcast %31 : vector<8x1xf32> to vector<8x128xf32>
    %33 = arith.mulf %24, %32 : vector<8x128xf32>
    %c16_i32_16 = arith.constant 16 : i32
    %34 = vector.broadcast %c16_i32_16 : i32 to vector<8x128xi32>
    %35 = arith.cmpi eq, %13, %34 : vector<8x128xi32>
    %cst_17 = arith.constant 0.000000e+00 : f32
    %36 = vector.broadcast %cst_17 : f32 to vector<8x128xf32>
    %37 = arith.select %35, %12, %36 : vector<8x128xi1>, vector<8x128xf32>
    %38 = arith.addf %33, %37 : vector<8x128xf32>
    %c0_18 = arith.constant 0 : index
    %c0_19 = arith.constant 0 : index
    %39 = vector.load %arg6[%c0_18, %c0_19] : memref<8x128xf32, #tpu.memory_space<vmem>>, vector<8x128xf32>
    tpu.vector_store %arg6[%c0_18, %c0_19], %38 {strides = array<i32>} : memref<8x128xf32, #tpu.memory_space<vmem>>, vector<8x128xf32>,
    return
  }
  func.func @transform_0(%arg0: i32) -> (i32, i32) {
    %c0_i32 = arith.constant 0 : i32
    %c0_i32_0 = arith.constant 0 : i32
    return %arg0, %c0_i32 : i32, i32
  }
  func.func @transform_1(%arg0: i32) -> (i32, i32) {
    %c0_i32 = arith.constant 0 : i32
    %c0_i32_0 = arith.constant 0 : i32
    %c0_i32_1 = arith.constant 0 : i32
    return %c0_i32, %c0_i32_0 : i32, i32
  }
  func.func @transform_2(%arg0: i32) -> (i32, i32) {
    %c0_i32 = arith.constant 0 : i32
    %c0_i32_0 = arith.constant 0 : i32
    %c0_i32_1 = arith.constant 0 : i32
    return %c0_i32, %c0_i32_0 : i32, i32
  }
  func.func @transform_3(%arg0: i32) -> (i32, i32) {
    %c0_i32 = arith.constant 0 : i32
    %c0_i32_0 = arith.constant 0 : i32
    %c0_i32_1 = arith.constant 0 : i32
    return %c0_i32, %c0_i32_0 : i32, i32
  }
  func.func @transform_4(%arg0: i32) -> (i32, i32) {
    %c0_i32 = arith.constant 0 : i32
    %c0_i32_0 = arith.constant 0 : i32
    %c0_i32_1 = arith.constant 0 : i32
    return %c0_i32, %c0_i32_0 : i32, i32
  }
  func.func @transform_5(%arg0: i32) -> (i32, i32) {
    %c0_i32 = arith.constant 0 : i32
    %c0_i32_0 = arith.constant 0 : i32
    return %arg0, %c0_i32 : i32, i32
  }
}

</mosaic_0001>

<llo_original>
// kernel: tpu_custom_call.1
$region0: #{tpu_custom_call.1}
  #allocation0 [shape = 'u32[]', space=smem, size = 0x4, offset = 0x4, fixed_abs, tag = 'smem constant byte address 0x4 - core index']
  #allocation1 [shape = 'u32[144,128]{1,0:T(1,128)}', space=vmem, size = 0x12000, scoped, tag = 'internal scratch']
  %s0 = inlined_call_operand.hbm [shape: f32[8,32], index: 0, kind: input, shape index: {}]
  %s1 = inlined_call_operand.hbm [shape: f32[32,128], index: 1, kind: input, shape index: {}]
  %s2 = inlined_call_operand.vmem [shape: f32[1,128], index: 2, kind: input, shape index: {}]
  %s3 = inlined_call_operand.hbm [shape: f32[128,128], index: 3, kind: input, shape index: {}]
  %s4 = inlined_call_operand.vmem [shape: f32[1,128], index: 4, kind: input, shape index: {}]
  %s5 = inlined_call_operand.hbm [shape: f32[8,128], index: 5, kind: output, shape index: {}]
  %s6 = sld [smem:[#allocation0]]
  $region42: #{tpu_custom_call.1} parent=0
    _
  %s8 = ssub.s32 1, %s6
  %s9 = scalar_select 0, %s8, %s6
  $region1: #{tpu_custom_call.1} parent=0
    #allocation2 [shape = 'u8[4096]{0}', space=vmem, size = 0x1000, scoped, tag = 'input window, operand 0, single buffered']
    #allocation3 [shape = 's32[1]{0}', space=sflag, size = 0x4, scoped, tag = 'scoped memory for tpu_custom_call.1']
    #allocation4 [shape = 's32[1]{0}', space=sflag, size = 0x4, scoped, tag = 'scoped memory for tpu_custom_call.1']
    #allocation5 [shape = 'u8[16384]{0}', space=vmem, size = 0x4000, scoped, tag = 'input window, operand 1, single buffered']
    #allocation6 [shape = 's32[1]{0}', space=sflag, size = 0x4, scoped, tag = 'scoped memory for tpu_custom_call.1']
    #allocation7 [shape = 'u8[65536]{0}', space=vmem, size = 0x10000, scoped, tag = 'input window, operand 3, single buffered']
    #allocation8 [shape = 'u8[4096]{0}', space=vmem, size = 0x1000, scoped, tag = 'output window, operand 0, single buffered']
    %10 = vsyncpa [#allocation3], 0
    %11 = vsyncpa [#allocation6], 0
    %12 = vsyncpa [#allocation4], 0
    // Predicated region
    $region2: #{tpu_custom_call.1} parent=1 // pred_check
      _
    $region3: #{tpu_custom_call.1} parent=1 // pred_check_branch
      %14 = sbr.rel (0) target = $region5
    $region4: #{tpu_custom_call.1} parent=1 // pred_region
      %s16 = ssub.s32 128, 128
      %17 = vsyncadd [#allocation3], %s16
      %s19 = sshll.u32 [#allocation2], 4
      %s20 = int_to_ptr.vmem [resolvable:$true] %s19
      %22 = dma.hbm_to_vmem [thread:$0]  %s0, 128, %s20, [#allocation3]
    $region5: #{tpu_custom_call.1} parent=1 // pred_fallthru
      _
    // Predicated region
    $region6: #{tpu_custom_call.1} parent=1 // pred_check
      _
    $region7: #{tpu_custom_call.1} parent=1 // pred_check_branch
      %24 = sbr.rel (0) target = $region9
    $region8: #{tpu_custom_call.1} parent=1 // pred_region
      %s26 = ssub.s32 512, 512
      %27 = vsyncadd [#allocation6], %s26
      %s28 = sshll.u32 [#allocation5], 4
      %s29 = int_to_ptr.vmem [resolvable:$true] %s28
      %34 = dma.hbm_to_vmem [thread:$0]  %s1, 512, %s29, [#allocation6], 128, 128, 8
    $region9: #{tpu_custom_call.1} parent=1 // pred_fallthru
      _
    // Predicated region
    $region10: #{tpu_custom_call.1} parent=1 // pred_check
      _
    $region11: #{tpu_custom_call.1} parent=1 // pred_check_branch
      %36 = sbr.rel (0) target = $region13
    $region12: #{tpu_custom_call.1} parent=1 // pred_region
      _
    $region13: #{tpu_custom_call.1} parent=1 // pred_fallthru
      _
    // Predicated region
    $region14: #{tpu_custom_call.1} parent=1 // pred_check
      _
    $region15: #{tpu_custom_call.1} parent=1 // pred_check_branch
      %38 = sbr.rel (0) target = $region17
    $region16: #{tpu_custom_call.1} parent=1 // pred_region
      %s40 = ssub.s32 2048, 2048
      %41 = vsyncadd [#allocation6], %s40
      %s42 = sshll.u32 [#allocation7], 4
      %s43 = int_to_ptr.vmem [resolvable:$true] %s42
      %48 = dma.hbm_to_vmem [thread:$0]  %s3, 2048, %s43, [#allocation6], 128, 128, 8
    $region17: #{tpu_custom_call.1} parent=1 // pred_fallthru
      _
    // Predicated region
    $region18: #{tpu_custom_call.1} parent=1 // pred_check
      _
    $region19: #{tpu_custom_call.1} parent=1 // pred_check_branch
      %50 = sbr.rel (0) target = $region21
    $region20: #{tpu_custom_call.1} parent=1 // pred_region
      _
    $region21: #{tpu_custom_call.1} parent=1 // pred_fallthru
      _
    // Predicated region
    $region22: #{tpu_custom_call.1} parent=1 // pred_check
      _
    $region23: #{tpu_custom_call.1} parent=1 // pred_check_branch
      %52 = sbr.rel (0) target = $region25
    $region24: #{tpu_custom_call.1} parent=1 // pred_region
      %53 = dma.done [#allocation3], 128
    $region25: #{tpu_custom_call.1} parent=1 // pred_fallthru
      _
    // Predicated region
    $region26: #{tpu_custom_call.1} parent=1 // pred_check
      _
    $region27: #{tpu_custom_call.1} parent=1 // pred_check_branch
      %55 = sbr.rel (0) target = $region29
    $region28: #{tpu_custom_call.1} parent=1 // pred_region
      %56 = dma.done [#allocation6], 512
    $region29: #{tpu_custom_call.1} parent=1 // pred_fallthru
      _
    // Predicated region
    $region30: #{tpu_custom_call.1} parent=1 // pred_check
      _
    $region31: #{tpu_custom_call.1} parent=1 // pred_check_branch
      %58 = sbr.rel (0) target = $region33
    $region32: #{tpu_custom_call.1} parent=1 // pred_region
      %59 = dma.done [#allocation6], 2048
    $region33: #{tpu_custom_call.1} parent=1 // pred_fallthru
      _
    %v60 = vld [vmem:[#allocation2] sm:$0xff]
    %v61 = vld [vmem:[#allocation5] sm:$0xff]
    %v62 = vld [vmem:[#allocation5 + $0x8] sm:$0xff]
    %v63 = vld [vmem:[#allocation5 + $0x10] sm:$0xff]
    %v64 = vld [vmem:[#allocation5 + $0x18] sm:$0xff]
    %v65 = vld [vmem:[%s2] sm:$0x1]
    %v67 = vlaneseq
    %v68 = vshrl.u32 %v67, 7
    %v69 = vsub.s32 0, %v68
    %v70 = vrot.slane %v65, %v69
    %vm72 = vcmask 261120
    %v74 = vsel %vm72, %v60, 0
    %76 = vmatprep.subr.mxu0 0.0
    %77 = vmatpush1.msra.mxu0 %v61
    %78 = vmatprep.subr.mxu0 0.0
    %79 = vmatpush1.msra.mxu0 %v62
    %80 = vmatprep.subr.mxu0 0.0
    %81 = vmatpush1.msra.mxu0 %v63
    %82 = vmatprep.subr.mxu0 0.0
    %83 = vmatpush1.msra.mxu0 %v64
    %84 = vmatprep.subr.mxu0 0.0
    %85 = vmatpush1.msra.mxu0 0.0
    %86 = vmatprep.subr.mxu0 0.0
    %87 = vmatpush1.msra.mxu0 0.0
    %88 = vmatprep.subr.mxu0 0.0
    %89 = vmatpush1.msra.mxu0 0.0
    %90 = vmatprep.subr.mxu0 0.0
    %91 = vmatpush1.msra.mxu0 0.0
    %92 = vmatprep.subr.mxu0 0.0
    %93 = vmatpush1.msra.mxu0 0.0
    %94 = vmatprep.subr.mxu0 0.0
    %95 = vmatpush1.msra.mxu0 0.0
    %96 = vmatprep.subr.mxu0 0.0
    %97 = vmatpush1.msra.mxu0 0.0
    %98 = vmatprep.subr.mxu0 0.0
    %99 = vmatpush1.msra.mxu0 0.0
    %100 = vmatprep.subr.mxu0 0.0
    %101 = vmatpush1.msra.mxu0 0.0
    %102 = vmatprep.subr.mxu0 0.0
    %103 = vmatpush1.msra.mxu0 0.0
    %104 = vmatprep.subr.mxu0 0.0
    %105 = vmatpush1.msra.mxu0 0.0
    %106 = vmatprep.subr.mxu0 0.0
    %107 = vmatpush1.msra.mxu0 0.0
    %108 = vmatprep.subr.mxu0 0.0
    %109 = vmatpush1.msra.mxu0 0.0
    %110 = vmatprep.subr.mxu0 0.0
    %111 = vmatpush1.msra.mxu0 0.0
    %112 = vmatprep.subr.mxu0 0.0
    %113 = vmatpush1.msra.mxu0 0.0
    %114 = vmatprep.subr.mxu0 0.0
    %115 = vmatpush1.msra.mxu0 0.0
    %116 = vmatprep.subr.mxu0 0.0
    %117 = vmatpush1.msra.mxu0 0.0
    %118 = vmatprep.subr.mxu0 0.0
    %119 = vmatpush1.msra.mxu0 0.0
    %120 = vmatprep.subr.mxu0 0.0
    %121 = vmatpush1.msra.mxu0 0.0
    %122 = vmatprep.subr.mxu0 0.0
    %123 = vmatpush1.msra.mxu0 0.0
    %124 = vmatprep.subr.mxu0 0.0
    %125 = vmatpush1.msra.mxu0 0.0
    %126 = vmatprep.subr.mxu0 0.0
    %127 = vmatpush1.msra.mxu0 0.0
    %128 = vmatprep.subr.mxu0 0.0
    %129 = vmatpush1.msra.mxu0 0.0
    %130 = vmatprep.subr.mxu0 0.0
    %131 = vmatpush1.msra.mxu0 0.0
    %132 = vmatprep.subr.mxu0 0.0
    %133 = vmatpush1.msra.mxu0 0.0
    %134 = vmatprep.subr.mxu0 0.0
    %135 = vmatpush1.msra.mxu0 0.0
    %136 = vmatprep.subr.mxu0 0.0
    %137 = vmatpush1.msra.mxu0 0.0
    %138 = vmatprep.subr.mxu0 0.0
    %139 = vmatpush1.msra.mxu0 0.0
    %140 = vmatprep.mubr.f32.mxu0 0.0
    %141 = vmatmul.mubr.f32.gmra.mrb[0].mxu0 %v74
    %v142 = vpop.f32.mrb[0].mxu0
    %v143 = vadd.f32 %v70, %v142
    %v144 = vpop.f32.mrb[0].mxu0
    %145 = vdwg.mxu0
    %v146 = vmax.f32 %v143, 0.0
    %v147 = vld [vmem:[#allocation7] sm:$0xff]
    %v148 = vld [vmem:[#allocation7 + $0x8] sm:$0xff]
    %v149 = vld [vmem:[#allocation7 + $0x10] sm:$0xff]
    %v150 = vld [vmem:[#allocation7 + $0x18] sm:$0xff]
    %v151 = vld [vmem:[#allocation7 + $0x20] sm:$0xff]
    %v152 = vld [vmem:[#allocation7 + $0x28] sm:$0xff]
    %v153 = vld [vmem:[#allocation7 + $0x30] sm:$0xff]
    %v154 = vld [vmem:[#allocation7 + $0x38] sm:$0xff]
    %v155 = vld [vmem:[#allocation7 + $0x40] sm:$0xff]
    %v156 = vld [vmem:[#allocation7 + $0x48] sm:$0xff]
    %v157 = vld [vmem:[#allocation7 + $0x50] sm:$0xff]
    %v158 = vld [vmem:[#allocation7 + $0x58] sm:$0xff]
    %v159 = vld [vmem:[#allocation7 + $0x60] sm:$0xff]
    %v160 = vld [vmem:[#allocation7 + $0x68] sm:$0xff]
    %v161 = vld [vmem:[#allocation7 + $0x70] sm:$0xff]
    %v162 = vld [vmem:[#allocation7 + $0x78] sm:$0xff]
    %v163 = vld [vmem:[%s4] sm:$0x1]
    %v165 = vlaneseq
    %v166 = vshrl.u32 %v165, 7
    %v167 = vsub.s32 0, %v166
    %v168 = vrot.slane %v163, %v167
    %170 = vmatprep.subr.mxu0 0.0
    %171 = vmatpush1.msra.mxu0 %v147
    %172 = vmatprep.subr.mxu0 0.0
    %173 = vmatpush1.msra.mxu0 %v148
    %174 = vmatprep.subr.mxu0 0.0
    %175 = vmatpush1.msra.mxu0 %v149
    %176 = vmatprep.subr.mxu0 0.0
    %177 = vmatpush1.msra.mxu0 %v150
    %178 = vmatprep.subr.mxu0 0.0
    %179 = vmatpush1.msra.mxu0 %v151
    %180 = vmatprep.subr.mxu0 0.0
    %181 = vmatpush1.msra.mxu0 %v152
    %182 = vmatprep.subr.mxu0 0.0
    %183 = vmatpush1.msra.mxu0 %v153
    %184 = vmatprep.subr.mxu0 0.0
    %185 = vmatpush1.msra.mxu0 %v154
    %186 = vmatprep.subr.mxu0 0.0
    %187 = vmatpush1.msra.mxu0 %v155
    %188 = vmatprep.subr.mxu0 0.0
    %189 = vmatpush1.msra.mxu0 %v156
    %190 = vmatprep.subr.mxu0 0.0
    %191 = vmatpush1.msra.mxu0 %v157
    %192 = vmatprep.subr.mxu0 0.0
    %193 = vmatpush1.msra.mxu0 %v158
    %194 = vmatprep.subr.mxu0 0.0
    %195 = vmatpush1.msra.mxu0 %v159
    %196 = vmatprep.subr.mxu0 0.0
    %197 = vmatpush1.msra.mxu0 %v160
    %198 = vmatprep.subr.mxu0 0.0
    %199 = vmatpush1.msra.mxu0 %v161
    %200 = vmatprep.subr.mxu0 0.0
    %201 = vmatpush1.msra.mxu0 %v162
    %202 = vmatprep.subr.mxu0 0.0
    %203 = vmatpush1.msra.mxu0 0.0
    %204 = vmatprep.subr.mxu0 0.0
    %205 = vmatpush1.msra.mxu0 0.0
    %206 = vmatprep.subr.mxu0 0.0
    %207 = vmatpush1.msra.mxu0 0.0
    %208 = vmatprep.subr.mxu0 0.0
    %209 = vmatpush1.msra.mxu0 0.0
    %210 = vmatprep.subr.mxu0 0.0
    %211 = vmatpush1.msra.mxu0 0.0
    %212 = vmatprep.subr.mxu0 0.0
    %213 = vmatpush1.msra.mxu0 0.0
    %214 = vmatprep.subr.mxu0 0.0
    %215 = vmatpush1.msra.mxu0 0.0
    %216 = vmatprep.subr.mxu0 0.0
    %217 = vmatpush1.msra.mxu0 0.0
    %218 = vmatprep.subr.mxu0 0.0
    %219 = vmatpush1.msra.mxu0 0.0
    %220 = vmatprep.subr.mxu0 0.0
    %221 = vmatpush1.msra.mxu0 0.0
    %222 = vmatprep.subr.mxu0 0.0
    %223 = vmatpush1.msra.mxu0 0.0
    %224 = vmatprep.subr.mxu0 0.0
    %225 = vmatpush1.msra.mxu0 0.0
    %226 = vmatprep.subr.mxu0 0.0
    %227 = vmatpush1.msra.mxu0 0.0
    %228 = vmatprep.subr.mxu0 0.0
    %229 = vmatpush1.msra.mxu0 0.0
    %230 = vmatprep.subr.mxu0 0.0
    %231 = vmatpush1.msra.mxu0 0.0
    %232 = vmatprep.subr.mxu0 0.0
    %233 = vmatpush1.msra.mxu0 0.0
    %234 = vmatprep.mubr.f32.mxu0 0.0
    %235 = vmatmul.mubr.f32.gmra.mrb[0].mxu0 %v146
    %v236 = vpop.f32.mrb[0].mxu0
    %v237 = vadd.f32 %v168, %v236
    %v238 = vpop.f32.mrb[0].mxu0
    %239 = vdwg.mxu0
    %v240 = vlaneseq
    %v241 = vand.u32 %v240, 127
    %vm242 = vcmp.lt.s32.totalorder %v241, 16
    %v243 = vsel %vm242, %v237, -inf
    %244 = vmax.xlane.f32.xlu0 %v243
    %v245 = vpop.xlane.xlu0 %244
    %v246 = vsub.f32 %v243, %v245
    %v247 = vmul.f32 %v246, 1.442695
    %v248 = vpow.pop %v247
    %v249 = vsel %vm242, %v248, 0.0
    %250 = vadd.xlane.f32.xlu0 %v249
    %v251 = vpop.xlane.xlu0 %250
    %v252 = vrcp.pop %v251
    %v253 = vmul.f32 %v251, %v252
    %v254 = vsub.f32 2.0, %v253
    %v255 = vmul.f32 %v252, %v254
    %v256 = vmul.f32 %v249, %v255
    %vm257 = vcmp.eq.s32.totalorder %v241, 16
    %v258 = vsel %vm257, %v237, 0.0
    %v259 = vadd.f32 %v256, %v258
    %260 = vst [vmem:[#allocation8] sm:$0xff] %v259
    // Predicated region
    $region34: #{tpu_custom_call.1} parent=1 // pred_check
      _
    $region35: #{tpu_custom_call.1} parent=1 // pred_check_branch
      %262 = sbr.rel (0) target = $region37
    $region36: #{tpu_custom_call.1} parent=1 // pred_region
      %s264 = ssub.s32 128, 128
      %265 = vsyncadd [#allocation4], %s264
      %s267 = sshll.u32 [#allocation8], 4
      %s268 = int_to_ptr.vmem [resolvable:$true] %s267
      %270 = dma.vmem_to_hbm [thread:$0]  %s268, 128, %s5, [#allocation4]
    $region37: #{tpu_custom_call.1} parent=1 // pred_fallthru
      _
    // Predicated region
    $region38: #{tpu_custom_call.1} parent=1 // pred_check
      _
    $region39: #{tpu_custom_call.1} parent=1 // pred_check_branch
      %272 = sbr.rel (0) target = $region41
    $region40: #{tpu_custom_call.1} parent=1 // pred_region
      %273 = dma.done [#allocation4], 128
    $region41: #{tpu_custom_call.1} parent=1 // pred_fallthru
      _
    %274 = vsyncpa [#allocation3], 1
    %275 = vsyncpa [#allocation6], 1
    %276 = vsyncpa [#allocation4], 1

</llo_original>
